<compile_context>
chip_gen: v7x
topology: tpu7x:2x2x1
jax: 0.10.0
libtpu: 0.0.40
codegen_flags: <defaults>
</compile_context>

<pallas_src>
import functools

import jax
import jax.numpy as jnp
from jax import lax
from jax.experimental import pallas as pl
from jax.experimental.pallas import tpu as pltpu

BN_EPS = 1e-5


def _round_up(v, m):
    return ((v + m - 1) // m) * m


# --------- phase 1: conv1 (k3, s1, p1, no bias) + per-tile BatchNorm partial stats ---------
def _conv1_stats_kernel(T, xm_ref, xl_ref, xr_ref, w1_ref, y_ref, st_ref):
    i = pl.program_id(1)
    n_i = pl.num_programs(1)
    R = xm_ref.shape[0]                                  # 2 * t_out_tile time steps

    x = xm_ref[...]                                      # (R, D)
    x_left = jnp.where(i == 0, 0.0, xl_ref[7:8, :])      # x[t0-1]  (zero pad at t==0)
    x_right = jnp.where(i == n_i - 1, 0.0, xr_ref[0:1, :])  # x[t0+R] (zero pad past the end)

    x_prev = jnp.concatenate([x_left, x[: R - 1]], axis=0)   # x[t-1]
    x_next = jnp.concatenate([x[1:], x_right], axis=0)       # x[t+1]

    # tap-fused conv1: one MXU matmul, K = 3*D
    a = jnp.concatenate([x_prev, x, x_next], axis=1)         # (R, 3D)
    y = jnp.dot(a, w1_ref[...], preferred_element_type=jnp.float32)  # (R, E)
    y_ref[...] = y

    # BatchNorm partial statistics over the valid (non-padded) time steps of this tile
    g = i * R + lax.broadcasted_iota(jnp.int32, (R, 1), 0)   # global time index
    yv = jnp.where(g < T, y, 0.0)
    st_ref[...] = jnp.concatenate(
        [jnp.sum(yv, axis=0, keepdims=True),
         jnp.sum(yv * yv, axis=0, keepdims=True)], axis=0)   # (2, E): sum / sumsq


# --------- phase 2: BN (batch stats) + ReLU + conv2 (k3, s2, p1, bias), even steps only ----
def _bn_relu_conv2_kernel(T, ym_ref, yl_ref, bn_ref, w2_ref, b2_ref, z_ref):
    i = pl.program_id(1)
    To = z_ref.shape[0]                                  # output-time tile

    scale = bn_ref[0:1, :]                               # gamma * rsqrt(var + eps)
    shift = bn_ref[1:2, :]                               # beta - mean * scale

    def bn_relu(y, valid):
        h = jnp.maximum(y * scale + shift, 0.0)
        return jnp.where(valid, h, 0.0)

    j = lax.broadcasted_iota(jnp.int32, (To, 1), 0)
    t_even = 2 * (i * To + j)                            # global time of h[2o]

    # stride-2 realised here: only the rows feeding even output steps are gathered
    h_even = bn_relu(ym_ref[pl.ds(0, To, stride=2), :], t_even < T)      # h[2o]
    h_odd = bn_relu(ym_ref[pl.ds(1, To, stride=2), :], t_even + 1 < T)   # h[2o+1]

    halo = jnp.maximum(yl_ref[7:8, :] * scale + shift, 0.0)              # h[2*o0 - 1]
    halo = jnp.where(i == 0, 0.0, halo)                                  # zero pad at t == -1
    h_odd_prev = jnp.concatenate([halo, h_odd[: To - 1]], axis=0)        # h[2o-1]

    # tap-fused conv2: one MXU matmul, K = 3*E
    a = jnp.concatenate([h_odd_prev, h_even, h_odd], axis=1)             # (To, 3E)
    z = jnp.dot(a, w2_ref[...], preferred_element_type=jnp.float32) + b2_ref[...]
    z_ref[...] = z.astype(z_ref.dtype)


def conv_embedding2(seq, w1, gamma, beta, w2, b2, *, block_t_out=128):
    """seq: (T, B, D) -> (T_out, B, E) with T_out = ceil(T / 2)."""
    T, B, D = seq.shape
    E = w1.shape[-1]
    T_out = (T + 1) // 2
    assert block_t_out % 8 == 0

    t_o = max(8, min(block_t_out, _round_up(T_out, 8)))  # output-time tile, multiple of 8
    n_t = pl.cdiv(T_out, t_o)
    To_p = n_t * t_o                                     # padded output length
    Tp = 2 * To_p                                        # padded input length
    R = 2 * t_o                                          # input time steps per tile
    hblk = t_o // 4                                      # halo-block stride (8-row blocks)
    nhb = Tp // 8

    x = jnp.transpose(seq, (1, 0, 2))                    # (B, T, D)
    if Tp != T:
        x = jnp.pad(x, ((0, 0), (0, Tp - T), (0, 0)))
    w1f = w1.reshape(3 * D, E)
    w2f = w2.reshape(3 * E, E)

    cp = pltpu.CompilerParams(
        dimension_semantics=("parallel", "parallel"),
        vmem_limit_bytes=32 * 1024 * 1024,
    )

    # ---- phase 1: conv1 + partial BN stats -------------------------------------------------
    y, stats = pl.pallas_call(
        functools.partial(_conv1_stats_kernel, T),
        grid=(B, n_t),
        in_specs=[
            pl.BlockSpec((None, R, D), lambda b, i: (b, i, 0)),
            pl.BlockSpec((None, 8, D),
                         lambda b, i: (b, jnp.maximum(i * hblk - 1, 0), 0)),
            pl.BlockSpec((None, 8, D),
                         lambda b, i: (b, jnp.minimum((i + 1) * hblk, nhb - 1), 0)),
            pl.BlockSpec((3 * D, E), lambda b, i: (0, 0)),
        ],
        out_specs=(
            pl.BlockSpec((None, R, E), lambda b, i: (b, i, 0)),
            pl.BlockSpec((None, None, 2, E), lambda b, i: (b, i, 0, 0)),
        ),
        out_shape=(
            jax.ShapeDtypeStruct((B, Tp, E), jnp.float32),
            jax.ShapeDtypeStruct((B, n_t, 2, E), jnp.float32),
        ),
        compiler_params=cp,
    )(x, x, x, w1f)

    # ---- finalize BatchNorm batch statistics (training mode, biased variance) -- tiny glue --
    tot = jnp.sum(stats, axis=(0, 1))                    # (2, E)
    n = T * B
    mean = tot[0] / n
    var = tot[1] / n - mean * mean
    scale = gamma.reshape(-1) * lax.rsqrt(var + BN_EPS)
    shift = beta.reshape(-1) - mean * scale
    bn = jnp.stack([scale, shift], axis=0)               # (2, E)

    # ---- phase 2: BN + ReLU + conv2 at even time steps only --------------------------------
    z = pl.pallas_call(
        functools.partial(_bn_relu_conv2_kernel, T),
        grid=(B, n_t),
        in_specs=[
            pl.BlockSpec((None, R, E), lambda b, i: (b, i, 0)),
            pl.BlockSpec((None, 8, E),
                         lambda b, i: (b, jnp.maximum(i * hblk - 1, 0), 0)),
            pl.BlockSpec((2, E), lambda b, i: (0, 0)),
            pl.BlockSpec((3 * E, E), lambda b, i: (0, 0)),
            pl.BlockSpec((1, E), lambda b, i: (0, 0)),
        ],
        out_specs=pl.BlockSpec((None, t_o, E), lambda b, i: (b, i, 0)),
        out_shape=jax.ShapeDtypeStruct((B, To_p, E), jnp.float32),
        compiler_params=cp,
    )(y, y, bn, w2f, b2)

    if To_p != T_out:
        z = z[:, :T_out, :]
    return jnp.transpose(z, (1, 0, 2))                   # (T_out, B, E)


def reference(seq, w1, gamma, beta, w2, b2):
    """Pure-JAX reference mirroring the PyTorch module (NCL convs, training-mode BN)."""
    x = jnp.transpose(seq, (1, 2, 0))                    # (B, D, T)
    wt1 = jnp.transpose(w1, (2, 1, 0))                   # (E, D, 3) == Conv1d weight layout
    y = lax.conv_general_dilated(
        x, wt1, window_strides=(1,), padding=((1, 1),),
        dimension_numbers=("NCH", "OIH", "NCH"))
    mean = jnp.mean(y, axis=(0, 2), keepdims=True)
    var = jnp.mean((y - mean) ** 2, axis=(0, 2), keepdims=True)
    h = (y - mean) / jnp.sqrt(var + BN_EPS)
    h = h * gamma.reshape(1, -1, 1) + beta.reshape(1, -1, 1)
    h = jnp.maximum(h, 0.0)
    wt2 = jnp.transpose(w2, (2, 1, 0))
    z = lax.conv_general_dilated(
        h, wt2, window_strides=(2,), padding=((1, 1),),
        dimension_numbers=("NCH", "OIH", "NCH"))
    z = z + b2.reshape(1, -1, 1)
    return jnp.transpose(z, (2, 0, 1))                   # (T_out, B, E)


if __name__ == "__main__":
    T, B, D, E = 32, 2, 8, 32  # seq len, batch, inp_dim, embed_dim

    key = jax.random.PRNGKey(0)
    k_seq, k_w1, k_g, k_b, k_w2, k_b2 = jax.random.split(key, 6)

    seq = jax.random.normal(k_seq, (T, B, D), dtype=jnp.float32)
    # Conv1d weights stored as (kernel_tap, in_channels, out_channels)
    w1 = 0.3 * jax.random.normal(k_w1, (3, D, E), dtype=jnp.float32)
    gamma = 1.0 + 0.1 * jax.random.normal(k_g, (1, E), dtype=jnp.float32)
    beta = 0.1 * jax.random.normal(k_b, (1, E), dtype=jnp.float32)
    w2 = 0.3 * jax.random.normal(k_w2, (3, E, E), dtype=jnp.float32)
    b2 = 0.1 * jax.random.normal(k_b2, (1, E), dtype=jnp.float32)

    # small time tile so the multi-tile / halo path is exercised (T_out=16 -> 2 tiles of 8)
    out = jax.block_until_ready(
        conv_embedding2(seq, w1, gamma, beta, w2, b2, block_t_out=8))
    ref = jax.block_until_ready(reference(seq, w1, gamma, beta, w2, b2))
    assert out.shape == ((T + 1) // 2, B, E), out.shape
    assert jnp.allclose(out, ref, rtol=2e-3, atol=2e-3), float(jnp.max(jnp.abs(out - ref)))

    # odd length + non-divisible T_out exercises the padding / masking path
    T2 = 13
    seq2 = seq[:T2]
    out2 = jax.block_until_ready(
        conv_embedding2(seq2, w1, gamma, beta, w2, b2, block_t_out=8))
    ref2 = jax.block_until_ready(reference(seq2, w1, gamma, beta, w2, b2))
    assert out2.shape == ((T2 + 1) // 2, B, E), out2.shape
    assert jnp.allclose(out2, ref2, rtol=2e-3, atol=2e-3), float(jnp.max(jnp.abs(out2 - ref2)))

    print("KERNEL_OK")
</pallas_src>

<mosaic_0001>
module attributes {stable_mosaic.version = 11 : i64} {
  func.func @_conv1_stats_kernel(%arg0: i32, %arg1: i32, %arg2: memref<1x16x8xf32, #tpu.memory_space<vmem>>, %arg3: memref<1x8x8xf32, #tpu.memory_space<vmem>>, %arg4: memref<1x8x8xf32, #tpu.memory_space<vmem>>, %arg5: memref<24x32xf32, #tpu.memory_space<vmem>>, %arg6: memref<1x16x32xf32, #tpu.memory_space<vmem>>, %arg7: memref<1x1x2x32xf32, #tpu.memory_space<vmem>>) attributes {dimension_semantics = [#tpu.dimension_semantics<parallel>, #tpu.dimension_semantics<parallel>], iteration_bounds = array<i64: 2, 2>, scalar_prefetch = 0 : i64, scratch_operands = 0 : i64, tpu.core_type = #tpu.core_type<tc>, window_params = [{transform_indices = @transform_0, window_bounds = array<i64: 1, 16, 8>}, {transform_indices = @transform_1, window_bounds = array<i64: 1, 8, 8>}, {transform_indices = @transform_2, window_bounds = array<i64: 1, 8, 8>}, {pipeline_mode = #tpu.pipeline_mode<synchronous>, transform_indices = @transform_3, window_bounds = array<i64: 24, 32>}, {transform_indices = @transform_4, window_bounds = array<i64: 1, 16, 32>}, {transform_indices = @transform_5, window_bounds = array<i64: 1, 1, 2, 32>}]} {
    %c0 = arith.constant 0 : index
    %c0_0 = arith.constant 0 : index
    %c0_1 = arith.constant 0 : index
    %0 = vector.load %arg2[%c0, %c0_0, %c0_1] : memref<1x16x8xf32, #tpu.memory_space<vmem>>, vector<1x16x8xf32>
    %1 = vector.shape_cast %0 : vector<1x16x8xf32> to vector<16x8xf32>
    %c0_i32 = arith.constant 0 : i32
    %2 = arith.cmpi eq, %arg1, %c0_i32 : i32
    %c0_2 = arith.constant 0 : index
    %c7 = arith.constant 7 : index
    %c0_3 = arith.constant 0 : index
    %3 = vector.load %arg3[%c0_2, %c7, %c0_3] : memref<1x8x8xf32, #tpu.memory_space<vmem>>, vector<1x1x8xf32>
    %4 = vector.shape_cast %3 : vector<1x1x8xf32> to vector<1x8xf32>
    %cst = arith.constant 0.000000e+00 : f32
    %5 = vector.broadcast %cst : f32 to vector<1x8xf32>
    %6 = arith.select %2, %5, %4 : vector<1x8xf32>
    %c1_i32 = arith.constant 1 : i32
    %7 = arith.cmpi eq, %arg1, %c1_i32 : i32
    %c0_4 = arith.constant 0 : index
    %c0_5 = arith.constant 0 : index
    %c0_6 = arith.constant 0 : index
    %8 = vector.load %arg4[%c0_4, %c0_5, %c0_6] : memref<1x8x8xf32, #tpu.memory_space<vmem>>, vector<1x1x8xf32>
    %9 = vector.shape_cast %8 : vector<1x1x8xf32> to vector<1x8xf32>
    %cst_7 = arith.constant 0.000000e+00 : f32
    %10 = vector.broadcast %cst_7 : f32 to vector<1x8xf32>
    %11 = arith.select %7, %10, %9 : vector<1x8xf32>
    %12 = vector.extract_strided_slice %1 {offsets = [0, 0], sizes = [15, 8], strides = [1, 1]} : vector<16x8xf32> to vector<15x8xf32>
    %13 = tpu.concatenate %6, %12 in 0 : vector<1x8xf32>, vector<15x8xf32> -> vector<16x8xf32>
    %14 = vector.extract_strided_slice %1 {offsets = [1, 0], sizes = [15, 8], strides = [1, 1]} : vector<16x8xf32> to vector<15x8xf32>
    %15 = tpu.concatenate %14, %11 in 0 : vector<15x8xf32>, vector<1x8xf32> -> vector<16x8xf32>
    %16 = tpu.concatenate %13, %1, %15 in 1 : vector<16x8xf32>, vector<16x8xf32>, vector<16x8xf32> -> vector<16x24xf32>
    %c0_8 = arith.constant 0 : index
    %c0_9 = arith.constant 0 : index
    %17 = vector.load %arg5[%c0_8, %c0_9] : memref<24x32xf32, #tpu.memory_space<vmem>>, vector<24x32xf32>
    %cst_10 = arith.constant dense<0.000000e+00> : vector<16x32xf32>
    %18 = tpu.matmul %16, %17, %cst_10 {dimension_numbers = #tpu.dot_dimension_numbers<[1], [0], [0], [1], [0, 0, 1, 1], [], []>} : vector<16x24xf32>, vector<24x32xf32>, vector<16x32xf32> -> vector<16x32xf32>
    %c0_11 = arith.constant 0 : index
    %c0_12 = arith.constant 0 : index
    %c0_13 = arith.constant 0 : index
    %19 = vector.load %arg6[%c0_11, %c0_12, %c0_13] : memref<1x16x32xf32, #tpu.memory_space<vmem>>, vector<1x16x32xf32>
    %20 = vector.shape_cast %19 : vector<1x16x32xf32> to vector<16x32xf32>
    %21 = vector.shape_cast %18 : vector<16x32xf32> to vector<1x16x32xf32>
    tpu.vector_store %arg6[%c0_11, %c0_12, %c0_13], %21 {strides = array<i32>} : memref<1x16x32xf32, #tpu.memory_space<vmem>>, vector<1x16x32xf32>,
    %c16_i32 = arith.constant 16 : i32
    %22 = arith.muli %arg1, %c16_i32 : i32
    %23 = tpu.iota {dimensions = array<i32: 0>} : vector<16x1xi32>
    %24 = vector.broadcast %22 : i32 to vector<16x1xi32>
    %25 = arith.addi %24, %23 : vector<16x1xi32>
    %c32_i32 = arith.constant 32 : i32
    %26 = vector.broadcast %c32_i32 : i32 to vector<16x1xi32>
    %27 = arith.cmpi slt, %25, %26 : vector<16x1xi32>
    %cst_14 = arith.constant 0.000000e+00 : f32
    %28 = vector.shape_cast %27 : vector<16x1xi1> to vector<16x1xi1>
    %29 = vector.broadcast %28 : vector<16x1xi1> to vector<16x32xi1>
    %30 = vector.broadcast %cst_14 : f32 to vector<16x32xf32>
    %31 = arith.select %29, %18, %30 : vector<16x32xi1>, vector<16x32xf32>
    %cst_15 = arith.constant dense<0.000000e+00> : vector<32xf32>
    %32 = vector.multi_reduction <add>, %31, %cst_15 [0] : vector<16x32xf32> to vector<32xf32>
    %33 = vector.shape_cast %32 : vector<32xf32> to vector<1x32xf32>
    %34 = arith.mulf %31, %31 : vector<16x32xf32>
    %cst_16 = arith.constant dense<0.000000e+00> : vector<32xf32>
    %35 = vector.multi_reduction <add>, %34, %cst_16 [0] : vector<16x32xf32> to vector<32xf32>
    %36 = vector.shape_cast %35 : vector<32xf32> to vector<1x32xf32>
    %37 = tpu.concatenate %33, %36 in 0 : vector<1x32xf32>, vector<1x32xf32> -> vector<2x32xf32>
    %c0_17 = arith.constant 0 : index
    %c0_18 = arith.constant 0 : index
    %c0_19 = arith.constant 0 : index
    %c0_20 = arith.constant 0 : index
    %38 = vector.load %arg7[%c0_17, %c0_18, %c0_19, %c0_20] : memref<1x1x2x32xf32, #tpu.memory_space<vmem>>, vector<1x1x2x32xf32>
    %39 = vector.shape_cast %38 : vector<1x1x2x32xf32> to vector<2x32xf32>
    %40 = vector.shape_cast %37 : vector<2x32xf32> to vector<1x1x2x32xf32>
    tpu.vector_store %arg7[%c0_17, %c0_18, %c0_19, %c0_20], %40 {strides = array<i32>} : memref<1x1x2x32xf32, #tpu.memory_space<vmem>>, vector<1x1x2x32xf32>,
    return
  }
  func.func @transform_0(%arg0: i32, %arg1: i32) -> (i32, i32, i32) {
    %c0_i32 = arith.constant 0 : i32
    %c0_i32_0 = arith.constant 0 : i32
    return %arg0, %arg1, %c0_i32 : i32, i32, i32
  }
  func.func @transform_1(%arg0: i32, %arg1: i32) -> (i32, i32, i32) {
    %c2_i32 = arith.constant 2 : i32
    %0 = arith.muli %arg1, %c2_i32 : i32
    %c1_i32 = arith.constant 1 : i32
    %1 = arith.subi %0, %c1_i32 : i32
    %c0_i32 = arith.constant 0 : i32
    %2 = arith.maxsi %1, %c0_i32 : i32
    %c0_i32_0 = arith.constant 0 : i32
    %c0_i32_1 = arith.constant 0 : i32
    return %arg0, %2, %c0_i32_0 : i32, i32, i32
  }
  func.func @transform_2(%arg0: i32, %arg1: i32) -> (i32, i32, i32) {
    %c1_i32 = arith.constant 1 : i32
    %0 = arith.addi %arg1, %c1_i32 : i32
    %c2_i32 = arith.constant 2 : i32
    %1 = arith.muli %0, %c2_i32 : i32
    %c3_i32 = arith.constant 3 : i32
    %2 = arith.minsi %1, %c3_i32 : i32
    %c0_i32 = arith.constant 0 : i32
    %c0_i32_0 = arith.constant 0 : i32
    return %arg0, %2, %c0_i32 : i32, i32, i32
  }
  func.func @transform_3(%arg0: i32, %arg1: i32) -> (i32, i32) {
    %c0_i32 = arith.constant 0 : i32
    %c0_i32_0 = arith.constant 0 : i32
    %c0_i32_1 = arith.constant 0 : i32
    return %c0_i32, %c0_i32_0 : i32, i32
  }
  func.func @transform_4(%arg0: i32, %arg1: i32) -> (i32, i32, i32) {
    %c0_i32 = arith.constant 0 : i32
    %c0_i32_0 = arith.constant 0 : i32
    return %arg0, %arg1, %c0_i32 : i32, i32, i32
  }
  func.func @transform_5(%arg0: i32, %arg1: i32) -> (i32, i32, i32, i32) {
    %c0_i32 = arith.constant 0 : i32
    %c0_i32_0 = arith.constant 0 : i32
    %c0_i32_1 = arith.constant 0 : i32
    return %arg0, %arg1, %c0_i32, %c0_i32_0 : i32, i32, i32, i32
  }
}

</mosaic_0001>

<llo_original>
// kernel: tpu_custom_call.1
$region0: #{tpu_custom_call.1}
  #allocation0 [shape = 'u32[]', space=smem, size = 0x4, offset = 0x4, fixed_abs, tag = 'smem constant byte address 0x4 - core index']
  #allocation1 [shape = 'u32[144,128]{1,0:T(1,128)}', space=vmem, size = 0x12000, scoped, tag = 'internal scratch']
  %s0 = inlined_call_operand.vmem [shape: f32[2,32,8], index: 0, kind: input, shape index: {}]
  %s1 = inlined_call_operand.vmem [shape: f32[2,32,8], index: 1, kind: input, shape index: {}]
  %s2 = inlined_call_operand.vmem [shape: f32[2,32,8], index: 2, kind: input, shape index: {}]
  %s3 = inlined_call_operand.vmem [shape: f32[24,32], index: 3, kind: input, shape index: {}]
  %s4 = inlined_call_operand.hbm [shape: f32[2,32,32], index: 4, kind: output, shape index: {0}]
  %s5 = inlined_call_operand.hbm [shape: f32[2,2,2,32], index: 5, kind: output, shape index: {1}]
  %6 = xla_tuple %s4, %s5
  %s7 = sld [smem:[#allocation0]]
  $region57: #{tpu_custom_call.1} parent=0
    _
  %s9 = ssub.s32 1, %s7
  %s10 = scalar_select 0, %s9, %s7
  $region1: #{tpu_custom_call.1} parent=0
    #allocation2 [shape = 'u8[16384]{0}', space=vmem, size = 0x4000, scoped, tag = 'output window, operand 0']
    #allocation3 [shape = 's32[2]{0}', space=sflag, size = 0x8, scoped, tag = 'scoped memory for tpu_custom_call.1']
    #allocation4 [shape = 'u8[2048]{0}', space=vmem, size = 0x800, scoped, tag = 'output window, operand 1']
    #allocation5 [shape = 's32[2]{0}', space=sflag, size = 0x8, scoped, tag = 'scoped memory for tpu_custom_call.1']
    %11 = vsyncpa [#allocation3], 0
    %s12 = scalar_lea.sflag [#allocation3], 1
    %13 = vsyncpa %s12, 0
    %14 = vsyncpa [#allocation5], 0
    %s15 = scalar_lea.sflag [#allocation5], 1
    %16 = vsyncpa %s15, 0
    loop: start=0, step=1, limit=6
    $region2: #{tpu_custom_call.1} parent=1 // loop_pre_header
      _
    $region3: #{tpu_custom_call.1} parent=1 // loop_header
      %s18 = sphi 0, %s22
      %p19 = scmp.ge.s32.totalorder %s18, 6
      %s25 = sphi 0, %s37
      %s26 = sphi 0, %s33
      %s27 = sphi 0, %s25
      %s28 = sphi 0, %s26
      %s29 = sphi 0, %s27
      %s30 = sphi 0, %s28
      %s42 = sphi 0, %s44
      %s45 = sphi 0, %s42
      %s46 = sphi 0, %s45
      %s62 = sphi 0, %s46
      %s78 = sphi 0, %s80
      %s81 = sphi 0, %s78
      %s82 = sphi 0, %s81
      %s98 = sphi 0, %s82
      %s114 = sphi 0, %s116
      %s117 = sphi 0, %s114
      %s118 = sphi 0, %s117
      %s134 = sphi 0, %s118
      %s138 = sphi 0, %s138
      %s140 = sphi 0, %s138
      %s141 = sphi 0, %s140
      %s155 = sphi 0, %s141
      %s163 = sphi 0, %s165
      %s166 = sphi 0, %s163
      %s167 = sphi 0, %s166
      %s183 = sphi 0, %s167
      %s191 = sphi 0, %s193
      %s194 = sphi 0, %s191
      %s195 = sphi 0, %s194
      %s211 = sphi 0, %s195
    $region4: #{tpu_custom_call.1} parent=1 // loop_header_branch
      %21 = sbr.rel (%p19) target = $region8
    $region5: #{tpu_custom_call.1} parent=1 // loop_body
      %s23 = ssub.s32 %s18, 1
      %s24 = ssub.s32 %s18, 2
      %s31 = sadd.s32 1, %s26
      %p32 = scmp.ge.s32.totalorder %s31, 2
      %s33 = scalar_select %p32, 0, %s31
      %s34 = sadd.s32 1, %s25
      %s35 = scalar_select %p32, %s34, %s25
      %p36 = scmp.ge.s32.totalorder %s35, 2
      %s37 = scalar_select %p36, 0, %s35
      %s38 = ssub.s32 %s25, %s37
      %s39 = ssub.s32 %s26, %s33
      %s40 = sor.u32 %s38, %s39
      %p41 = scmp.eq.s32.totalorder %s40, 0
      %s43 = sadd.s32 %s42, 1
      %s44 = scalar_select %p41, %s42, %s43
      %p47 = pneg %p41
      %p48 = scmp.eq.s32.totalorder %s18, 3
      %p49 = por %p47, %p48
      %p50 = scmp.ne.s32.totalorder %s42, %s45
      %p51 = scmp.eq.s32.totalorder %s18, 0
      %p52 = por %p50, %p51
      %p53 = scmp.ne.s32.totalorder %s42, %s45
      %p54 = scmp.eq.s32.totalorder %s23, 3
      %p55 = por %p53, %p54
      %p56 = scmp.ne.s32.totalorder %s45, %s46
      %p57 = scmp.eq.s32.totalorder %s23, 0
      %p58 = por %p56, %p57
      %p59 = scmp.ne.s32.totalorder %s45, %s46
      %p60 = scmp.eq.s32.totalorder %s24, 3
      %p61 = por %p59, %p60
      %p63 = scmp.ne.s32.totalorder %s46, %s62
      %p64 = scmp.eq.s32.totalorder %s24, 0
      %p65 = por %p63, %p64
      %s66 = smul.u32 %s26, 2
      %s67 = ssub.s32 %s66, 1
      %p68 = scmp.gt.s32.totalorder %s67, 0
      %s69 = scalar_select %p68, %s67, 0
      %s70 = smul.u32 %s33, 2
      %s71 = ssub.s32 %s70, 1
      %p72 = scmp.gt.s32.totalorder %s71, 0
      %s73 = scalar_select %p72, %s71, 0
      %s74 = ssub.s32 %s25, %s37
      %s75 = ssub.s32 %s69, %s73
      %s76 = sor.u32 %s74, %s75
      %p77 = scmp.eq.s32.totalorder %s76, 0
      %s79 = sadd.s32 %s78, 1
      %s80 = scalar_select %p77, %s78, %s79
      %p83 = pneg %p77
      %p84 = scmp.eq.s32.totalorder %s18, 3
      %p85 = por %p83, %p84
      %p86 = scmp.ne.s32.totalorder %s78, %s81
      %p87 = scmp.eq.s32.totalorder %s18, 0
      %p88 = por %p86, %p87
      %p89 = scmp.ne.s32.totalorder %s78, %s81
      %p90 = scmp.eq.s32.totalorder %s23, 3
      %p91 = por %p89, %p90
      %p92 = scmp.ne.s32.totalorder %s81, %s82
      %p93 = scmp.eq.s32.totalorder %s23, 0
      %p94 = por %p92, %p93
      %p95 = scmp.ne.s32.totalorder %s81, %s82
      %p96 = scmp.eq.s32.totalorder %s24, 3
      %p97 = por %p95, %p96
      %p99 = scmp.ne.s32.totalorder %s82, %s98
      %p100 = scmp.eq.s32.totalorder %s24, 0
      %p101 = por %p99, %p100
      %s102 = sadd.s32 %s26, 1
      %s103 = smul.u32 %s102, 2
      %p104 = scmp.lt.s32.totalorder %s103, 3
      %s105 = scalar_select %p104, %s103, 3
      %s106 = sadd.s32 %s33, 1
      %s107 = smul.u32 %s106, 2
      %p108 = scmp.lt.s32.totalorder %s107, 3
      %s109 = scalar_select %p108, %s107, 3
      %s110 = ssub.s32 %s25, %s37
      %s111 = ssub.s32 %s105, %s109
      %s112 = sor.u32 %s110, %s111
      %p113 = scmp.eq.s32.totalorder %s112, 0
      %s115 = sadd.s32 %s114, 1
      %s116 = scalar_select %p113, %s114, %s115
      %p119 = pneg %p113
      %p120 = scmp.eq.s32.totalorder %s18, 3
      %p121 = por %p119, %p120
      %p122 = scmp.ne.s32.totalorder %s114, %s117
      %p123 = scmp.eq.s32.totalorder %s18, 0
      %p124 = por %p122, %p123
      %p125 = scmp.ne.s32.totalorder %s114, %s117
      %p126 = scmp.eq.s32.totalorder %s23, 3
      %p127 = por %p125, %p126
      %p128 = scmp.ne.s32.totalorder %s117, %s118
      %p129 = scmp.eq.s32.totalorder %s23, 0
      %p130 = por %p128, %p129
      %p131 = scmp.ne.s32.totalorder %s117, %s118
      %p132 = scmp.eq.s32.totalorder %s24, 3
      %p133 = por %p131, %p132
      %p135 = scmp.ne.s32.totalorder %s118, %s134
      %p136 = scmp.eq.s32.totalorder %s24, 0
      %p137 = por %p135, %p136
      %s139 = sadd.s32 %s138, 1
      %p142 = scmp.eq.s32.totalorder %s18, 3
      %p143 = scmp.ne.s32.totalorder %s138, %s140
      %p144 = scmp.eq.s32.totalorder %s18, 0
      %p145 = por %p143, %p144
      %p146 = scmp.ne.s32.totalorder %s138, %s140
      %p147 = scmp.eq.s32.totalorder %s23, 3
      %p148 = por %p146, %p147
      %p149 = scmp.ne.s32.totalorder %s140, %s141
      %p150 = scmp.eq.s32.totalorder %s23, 0
      %p151 = por %p149, %p150
      %p152 = scmp.ne.s32.totalorder %s140, %s141
      %p153 = scmp.eq.s32.totalorder %s24, 3
      %p154 = por %p152, %p153
      %p156 = scmp.ne.s32.totalorder %s141, %s155
      %p157 = scmp.eq.s32.totalorder %s24, 0
      %p158 = por %p156, %p157
      %s159 = ssub.s32 %s25, %s37
      %s160 = ssub.s32 %s26, %s33
      %s161 = sor.u32 %s159, %s160
      %p162 = scmp.eq.s32.totalorder %s161, 0
      %s164 = sadd.s32 %s163, 1
      %s165 = scalar_select %p162, %s163, %s164
      %p168 = pneg %p162
      %p169 = scmp.eq.s32.totalorder %s18, 3
      %p170 = por %p168, %p169
      %p171 = scmp.ne.s32.totalorder %s163, %s166
      %p172 = scmp.eq.s32.totalorder %s18, 0
      %p173 = por %p171, %p172
      %p174 = scmp.ne.s32.totalorder %s163, %s166
      %p175 = scmp.eq.s32.totalorder %s23, 3
      %p176 = por %p174, %p175
      %p177 = scmp.ne.s32.totalorder %s166, %s167
      %p178 = scmp.eq.s32.totalorder %s23, 0
      %p179 = por %p177, %p178
      %p180 = scmp.ne.s32.totalorder %s166, %s167
      %p181 = scmp.eq.s32.totalorder %s24, 3
      %p182 = por %p180, %p181
      %p184 = scmp.ne.s32.totalorder %s167, %s183
      %p185 = scmp.eq.s32.totalorder %s24, 0
      %p186 = por %p184, %p185
      %s187 = ssub.s32 %s25, %s37
      %s188 = ssub.s32 %s26, %s33
      %s189 = sor.u32 %s187, %s188
      %p190 = scmp.eq.s32.totalorder %s189, 0
      %s192 = sadd.s32 %s191, 1
      %s193 = scalar_select %p190, %s191, %s192
      %p196 = pneg %p190
      %p197 = scmp.eq.s32.totalorder %s18, 3
      %p198 = por %p196, %p197
      %p199 = scmp.ne.s32.totalorder %s191, %s194
      %p200 = scmp.eq.s32.totalorder %s18, 0
      %p201 = por %p199, %p200
      %p202 = scmp.ne.s32.totalorder %s191, %s194
      %p203 = scmp.eq.s32.totalorder %s23, 3
      %p204 = por %p202, %p203
      %p205 = scmp.ne.s32.totalorder %s194, %s195
      %p206 = scmp.eq.s32.totalorder %s23, 0
      %p207 = por %p205, %p206
      %p208 = scmp.ne.s32.totalorder %s194, %s195
      %p209 = scmp.eq.s32.totalorder %s24, 3
      %p210 = por %p208, %p209
      %p212 = scmp.ne.s32.totalorder %s195, %s211
      %p213 = scmp.eq.s32.totalorder %s24, 0
      %p214 = por %p212, %p213
      %p215 = scmp.le.s32.totalorder 1, %s18
      %p216 = scmp.lt.s32.totalorder %s18, 5
      %p217 = pnand %p215, %p216
      %p218 = pneg %p217
      // Predicated region
      $region9: #{tpu_custom_call.1} parent=5 // pred_check
        _
      $region10: #{tpu_custom_call.1} parent=5 // pred_check_branch
        %220 = sbr.rel (%p217) target = $region12
      $region11: #{tpu_custom_call.1} parent=5 // pred_region
        %s221 = ssub.s32 %s18, 1
        // Predicated region
        $region13: #{tpu_custom_call.1} parent=11 // pred_check
          %p222 = pneg %p151
        $region14: #{tpu_custom_call.1} parent=11 // pred_check_branch
          %224 = sbr.rel (%p222) target = $region16
        $region15: #{tpu_custom_call.1} parent=11 // pred_region
          _
        $region16: #{tpu_custom_call.1} parent=11 // pred_fallthru
          _
      $region12: #{tpu_custom_call.1} parent=5 // pred_fallthru
        _
      %p225 = scmp.lt.s32.totalorder %s18, 4
      // Predicated region
      $region17: #{tpu_custom_call.1} parent=5 // pred_check
        %p226 = pneg %p225
      $region18: #{tpu_custom_call.1} parent=5 // pred_check_branch
        %228 = sbr.rel (%p226) target = $region20
      $region19: #{tpu_custom_call.1} parent=5 // pred_region
        // Predicated region
        $region21: #{tpu_custom_call.1} parent=19 // pred_check
          %p229 = pneg %p52
        $region22: #{tpu_custom_call.1} parent=19 // pred_check_branch
          %231 = sbr.rel (%p229) target = $region24
        $region23: #{tpu_custom_call.1} parent=19 // pred_region
          %s232 = smul.u32 2, %s26
          %p233 = scmp.lt.s32.totalorder %s25, 1
          %s234 = scalar_select %p233, %s25, 1
          %p235 = scmp.lt.s32.totalorder %s232, 3
          %s236 = scalar_select %p235, %s232, 3
          %s237 = smul.addr %s234, 4
          %s238 = sadd.s32 %s236, %s237
          %s239 = smul.addr %s238, 8
          %s240 = scalar_lea.vmem %s0, %s239
          %s241 = smul.u32 2, %s26
        $region24: #{tpu_custom_call.1} parent=19 // pred_fallthru
          _
        // Predicated region
        $region25: #{tpu_custom_call.1} parent=19 // pred_check
          %p242 = pneg %p88
        $region26: #{tpu_custom_call.1} parent=19 // pred_check_branch
          %244 = sbr.rel (%p242) target = $region28
        $region27: #{tpu_custom_call.1} parent=19 // pred_region
          %s245 = smul.u32 %s26, 2
          %s246 = ssub.s32 %s245, 1
          %p247 = scmp.gt.s32.totalorder %s246, 0
          %s248 = scalar_select %p247, %s246, 0
          %p249 = scmp.lt.s32.totalorder %s25, 1
          %s250 = scalar_select %p249, %s25, 1
          %p251 = scmp.lt.s32.totalorder %s248, 3
          %s252 = scalar_select %p251, %s248, 3
          %s253 = smul.addr %s250, 4
          %s254 = sadd.s32 %s252, %s253
          %s255 = smul.addr %s254, 8
          %s256 = scalar_lea.vmem %s1, %s255
          %s257 = smul.u32 %s26, 2
          %s258 = ssub.s32 %s257, 1
          %p259 = scmp.gt.s32.totalorder %s258, 0
          %s260 = scalar_select %p259, %s258, 0
        $region28: #{tpu_custom_call.1} parent=19 // pred_fallthru
          _
        // Predicated region
        $region29: #{tpu_custom_call.1} parent=19 // pred_check
          %p261 = pneg %p124
        $region30: #{tpu_custom_call.1} parent=19 // pred_check_branch
          %263 = sbr.rel (%p261) target = $region32
        $region31: #{tpu_custom_call.1} parent=19 // pred_region
          %s264 = sadd.s32 %s26, 1
          %s265 = smul.u32 %s264, 2
          %p266 = scmp.lt.s32.totalorder %s265, 3
          %s267 = scalar_select %p266, %s265, 3
          %p268 = scmp.lt.s32.totalorder %s25, 1
          %s269 = scalar_select %p268, %s25, 1
          %p270 = scmp.lt.s32.totalorder %s267, 3
          %s271 = scalar_select %p270, %s267, 3
          %s272 = smul.addr %s269, 4
          %s273 = sadd.s32 %s271, %s272
          %s274 = smul.addr %s273, 8
          %s275 = scalar_lea.vmem %s2, %s274
          %s276 = sadd.s32 %s26, 1
          %s277 = smul.u32 %s276, 2
          %p278 = scmp.lt.s32.totalorder %s277, 3
          %s279 = scalar_select %p278, %s277, 3
        $region32: #{tpu_custom_call.1} parent=19 // pred_fallthru
          _
      $region20: #{tpu_custom_call.1} parent=5 // pred_fallthru
        _
      %p280 = scmp.le.s32.totalorder 1, %s18
      %p281 = scmp.lt.s32.totalorder %s18, 5
      %p282 = pnand %p280, %p281
      %p283 = pneg %p282
      // Predicated region
      $region33: #{tpu_custom_call.1} parent=5 // pred_check
        _
      $region34: #{tpu_custom_call.1} parent=5 // pred_check_branch
        %285 = sbr.rel (%p282) target = $region36
      $region35: #{tpu_custom_call.1} parent=5 // pred_region
        %s286 = ssub.s32 %s18, 1
        %s287 = smul.u32 2, %s28
        %p288 = scmp.lt.s32.totalorder %s27, 1
        %s289 = scalar_select %p288, %s27, 1
        %p290 = scmp.lt.s32.totalorder %s287, 3
        %s291 = scalar_select %p290, %s287, 3
        %s292 = smul.addr %s289, 4
        %s293 = sadd.s32 %s291, %s292
        %s294 = smul.addr %s293, 8
        %s295 = scalar_lea.vmem %s0, %s294
        %p296 = pneg %p58
        %p297 = pneg %p55
        %s298 = smul.u32 %s28, 2
        %s299 = ssub.s32 %s298, 1
        %p300 = scmp.gt.s32.totalorder %s299, 0
        %s301 = scalar_select %p300, %s299, 0
        %p302 = scmp.lt.s32.totalorder %s27, 1
        %s303 = scalar_select %p302, %s27, 1
        %p304 = scmp.lt.s32.totalorder %s301, 3
        %s305 = scalar_select %p304, %s301, 3
        %s306 = smul.addr %s303, 4
        %s307 = sadd.s32 %s305, %s306
        %s308 = smul.addr %s307, 8
        %s309 = scalar_lea.vmem %s1, %s308
        %p310 = pneg %p94
        %p311 = pneg %p91
        %s312 = sadd.s32 %s28, 1
        %s313 = smul.u32 %s312, 2
        %p314 = scmp.lt.s32.totalorder %s313, 3
        %s315 = scalar_select %p314, %s313, 3
        %p316 = scmp.lt.s32.totalorder %s27, 1
        %s317 = scalar_select %p316, %s27, 1
        %p318 = scmp.lt.s32.totalorder %s315, 3
        %s319 = scalar_select %p318, %s315, 3
        %s320 = smul.addr %s317, 4
        %s321 = sadd.s32 %s319, %s320
        %s322 = smul.addr %s321, 8
        %s323 = scalar_lea.vmem %s2, %s322
        %p324 = pneg %p130
        %p325 = pneg %p127
        %p326 = pneg %p151
        %p327 = pneg %p148
        %p328 = pneg %p179
        %p329 = pneg %p176
        %s330 = sand.u32 %s166, 1
        %s331 = scalar_lea.sflag [#allocation3], %s330
        %s332 = sand.u32 %s166, 1
        %s333 = smul.addr %s332, 16
        %s334 = scalar_lea.vmem [#allocation2], %s333
        %p335 = pneg %p207
        %p336 = pneg %p204
        %s337 = sand.u32 %s194, 1
        %s338 = scalar_lea.sflag [#allocation5], %s337
        %s339 = sand.u32 %s194, 1
        %s340 = smul.addr %s339, 2
        %s341 = scalar_lea.vmem [#allocation4], %s340
        %s342 = smul.u32 2, %s28
        %p343 = scmp.lt.s32.totalorder %s27, 1
        %s344 = scalar_select %p343, %s27, 1
        %p345 = scmp.lt.s32.totalorder %s342, 3
        %s346 = scalar_select %p345, %s342, 3
        %s347 = smul.addr %s344, 4
        %s348 = sadd.s32 %s346, %s347
        %s349 = smul.addr %s348, 8
        %s350 = scalar_lea.vmem %s0, %s349
        %s351 = smul.u32 2, %s28
        %s352 = smul.u32 %s28, 2
        %s353 = ssub.s32 %s352, 1
        %p354 = scmp.gt.s32.totalorder %s353, 0
        %s355 = scalar_select %p354, %s353, 0
        %p356 = scmp.lt.s32.totalorder %s27, 1
        %s357 = scalar_select %p356, %s27, 1
        %p358 = scmp.lt.s32.totalorder %s355, 3
        %s359 = scalar_select %p358, %s355, 3
        %s360 = smul.addr %s357, 4
        %s361 = sadd.s32 %s359, %s360
        %s362 = smul.addr %s361, 8
        %s363 = scalar_lea.vmem %s1, %s362
        %s364 = smul.u32 %s28, 2
        %s365 = ssub.s32 %s364, 1
        %p366 = scmp.gt.s32.totalorder %s365, 0
        %s367 = scalar_select %p366, %s365, 0
        %s368 = sadd.s32 %s28, 1
        %s369 = smul.u32 %s368, 2
        %p370 = scmp.lt.s32.totalorder %s369, 3
        %s371 = scalar_select %p370, %s369, 3
        %p372 = scmp.lt.s32.totalorder %s27, 1
        %s373 = scalar_select %p372, %s27, 1
        %p374 = scmp.lt.s32.totalorder %s371, 3
        %s375 = scalar_select %p374, %s371, 3
        %s376 = smul.addr %s373, 4
        %s377 = sadd.s32 %s375, %s376
        %s378 = smul.addr %s377, 8
        %s379 = scalar_lea.vmem %s2, %s378
        %s380 = sadd.s32 %s28, 1
        %s381 = smul.u32 %s380, 2
        %p382 = scmp.lt.s32.totalorder %s381, 3
        %s383 = scalar_select %p382, %s381, 3
        %s384 = smul.u32 2, %s28
        %v385 = vld [vmem:[%s350] sm:$0xff]
        %v386 = vld [vmem:[%s350 + $0x8] sm:$0xff]
        %p387 = scmp.eq.s32.totalorder %s28, 0
        %v388 = vld [vmem:[%s363 + $0x7] sm:$0x1]
        %s389 = scalar_select %p387, 1, 0
        %v390 = vstv %s389
        %vm391 = vcmp.eq.s32.totalorder %v390, 1
        %v392 = vsel %vm391, 0.0, %v388
        %p393 = scmp.eq.s32.totalorder %s28, 1
        %v394 = vld [vmem:[%s379] sm:$0x1]
        %s395 = scalar_select %p393, 1, 0
        %v396 = vstv %s395
        %vm397 = vcmp.eq.s32.totalorder %v396, 1
        %v398 = vsel %vm397, 0.0, %v394
        %vm401 = vcmask 1040384
        %v402 = vrot.slane %v385, 7
        %v403 = vrot.slane %v386, 7
        %v404 = vsel %vm401, %v402, %v403
        %v407 = vsel %vm401, %v392, %v402
        %vm408 = vcmask 1046528
        %v409 = vrot.slane %v385, 1
        %v410 = vrot.slane %v386, 1
        %v411 = vsel %vm408, %v409, %v410
        %v414 = vrot.slane %v398, 1
        %v416 = vsel %vm408, %v410, %v414
        %417 = vrot.lane.b32.xlu0 %v385, 8
        %v418 = vpop.permute.xlu0 %417
        %419 = vrot.lane.b32.xlu0 %v386, 8
        %v420 = vpop.permute.xlu0 %419
        %424 = vrot.lane.b32.xlu0 %v411, 16
        %v425 = vpop.permute.xlu0 %424
        %426 = vrot.lane.b32.xlu0 %v416, 16
        %v427 = vpop.permute.xlu0 %426
        %vm430 = vcmask 64512
        %v431 = vsel %vm430, %v407, %v418
        %v432 = vsel %vm430, %v404, %v420
        %vm433 = vcmask 130048
        %v434 = vsel %vm433, %v431, %v425
        %v435 = vsel %vm433, %v432, %v427
        %v436 = vld [vmem:[%s3] sm:$0xff]
        %v437 = vld [vmem:[%s3 + $0x8] sm:$0xff]
        %v438 = vld [vmem:[%s3 + $0x10] sm:$0xff]
        %vm439 = vcmask 195584
        %v441 = vsel %vm439, %v434, 0
        %v444 = vsel %vm439, %v435, 0
        %446 = vmatprep.subr.mxu0 0.0
        %447 = vmatpush1.msra.mxu0 %v436
        %448 = vmatprep.subr.mxu0 0.0
        %449 = vmatpush1.msra.mxu0 %v437
        %450 = vmatprep.subr.mxu0 0.0
        %451 = vmatpush1.msra.mxu0 %v438
        %452 = vmatprep.subr.mxu0 0.0
        %453 = vmatpush1.msra.mxu0 0.0
        %454 = vmatprep.subr.mxu0 0.0
        %455 = vmatpush1.msra.mxu0 0.0
        %456 = vmatprep.subr.mxu0 0.0
        %457 = vmatpush1.msra.mxu0 0.0
        %458 = vmatprep.subr.mxu0 0.0
        %459 = vmatpush1.msra.mxu0 0.0
        %460 = vmatprep.subr.mxu0 0.0
        %461 = vmatpush1.msra.mxu0 0.0
        %462 = vmatprep.subr.mxu0 0.0
        %463 = vmatpush1.msra.mxu0 0.0
        %464 = vmatprep.subr.mxu0 0.0
        %465 = vmatpush1.msra.mxu0 0.0
        %466 = vmatprep.subr.mxu0 0.0
        %467 = vmatpush1.msra.mxu0 0.0
        %468 = vmatprep.subr.mxu0 0.0
        %469 = vmatpush1.msra.mxu0 0.0
        %470 = vmatprep.subr.mxu0 0.0
        %471 = vmatpush1.msra.mxu0 0.0
        %472 = vmatprep.subr.mxu0 0.0
        %473 = vmatpush1.msra.mxu0 0.0
        %474 = vmatprep.subr.mxu0 0.0
        %475 = vmatpush1.msra.mxu0 0.0
        %476 = vmatprep.subr.mxu0 0.0
        %477 = vmatpush1.msra.mxu0 0.0
        %478 = vmatprep.subr.mxu0 0.0
        %479 = vmatpush1.msra.mxu0 0.0
        %480 = vmatprep.subr.mxu0 0.0
        %481 = vmatpush1.msra.mxu0 0.0
        %482 = vmatprep.subr.mxu0 0.0
        %483 = vmatpush1.msra.mxu0 0.0
        %484 = vmatprep.subr.mxu0 0.0
        %485 = vmatpush1.msra.mxu0 0.0
        %486 = vmatprep.subr.mxu0 0.0
        %487 = vmatpush1.msra.mxu0 0.0
        %488 = vmatprep.subr.mxu0 0.0
        %489 = vmatpush1.msra.mxu0 0.0
        %490 = vmatprep.subr.mxu0 0.0
        %491 = vmatpush1.msra.mxu0 0.0
        %492 = vmatprep.subr.mxu0 0.0
        %493 = vmatpush1.msra.mxu0 0.0
        %494 = vmatprep.subr.mxu0 0.0
        %495 = vmatpush1.msra.mxu0 0.0
        %496 = vmatprep.subr.mxu0 0.0
        %497 = vmatpush1.msra.mxu0 0.0
        %498 = vmatprep.subr.mxu0 0.0
        %499 = vmatpush1.msra.mxu0 0.0
        %500 = vmatprep.subr.mxu0 0.0
        %501 = vmatpush1.msra.mxu0 0.0
        %502 = vmatprep.subr.mxu0 0.0
        %503 = vmatpush1.msra.mxu0 0.0
        %504 = vmatprep.subr.mxu0 0.0
        %505 = vmatpush1.msra.mxu0 0.0
        %506 = vmatprep.subr.mxu0 0.0
        %507 = vmatpush1.msra.mxu0 0.0
        %508 = vmatprep.subr.mxu0 0.0
        %509 = vmatpush1.msra.mxu0 0.0
        %510 = vmatprep.mubr.f32.mxu0 0.0
        %511 = vmatmul.mubr.f32.gmra.mrb[0].mxu0 %v441
        %v512 = vpop.f32.mrb[0].mxu0
        %v513 = vadd.f32 0.0, %v512
        %v514 = vpop.f32.mrb[0].mxu0
        %515 = vmatprep.mubr.f32.mxu0 0.0
        %516 = vmatmul.mubr.f32.gmra.mrb[0].mxu0 %v444
        %v517 = vpop.f32.mrb[0].mxu0
        %v518 = vadd.f32 0.0, %v517
        %v519 = vpop.f32.mrb[0].mxu0
        %520 = vdwg.mxu0
        %vm521 = vcmask 261120
        %522 = vst.msk [vmem:[%s334] sm:$0xff] %vm521, %v513
        %523 = vst.msk [vmem:[%s334 + $0x8] sm:$0xff] %vm521, %v518
        %s524 = smul.u32 %s28, 16
        %v525 = vlaneseq
        %v526 = vshrl.u32 %v525, 7
        %v527 = vadd.s32 %v526, 8
        %v528 = vstv %s524
        %v529 = vadd.s32 %v528, %v526
        %v530 = vadd.s32 %v528, %v527
        %vm531 = vcmp.lt.s32.totalorder %v529, 32
        %vm532 = vcmp.lt.s32.totalorder %v530, 32
        %v533 = vsel %vm531, 1, 0
        %v534 = vsel %vm532, 1, 0
        %vm535 = vcmp.eq.s32.totalorder %v533, 1
        %vm536 = vcmp.eq.s32.totalorder %v534, 1
        %v537 = vsel %vm535, %v513, 0.0
        %v538 = vsel %vm536, %v518, 0.0
        %v539 = vsel %vm521, %v537, 0.0
        %v540 = vsel %vm521, %v538, 0.0
        %v541 = vadd.f32 %v539, %v540
        %v542 = vrot.slane %v541, 4
        %v543 = vadd.f32 %v541, %v542
        %v544 = vrot.slane %v543, 2
        %v545 = vadd.f32 %v543, %v544
        %v546 = vrot.slane %v545, 1
        %v547 = vadd.f32 %v545, %v546
        %v548 = vmul.f32 %v537, %v537
        %v549 = vmul.f32 %v538, %v538
        %v550 = vsel %vm521, %v548, 0.0
        %v551 = vsel %vm521, %v549, 0.0
        %v552 = vadd.f32 %v550, %v551
        %v553 = vrot.slane %v552, 4
        %v554 = vadd.f32 %v552, %v553
        %v555 = vrot.slane %v554, 2
        %v556 = vadd.f32 %v554, %v555
        %v557 = vrot.slane %v556, 1
        %v558 = vadd.f32 %v556, %v557
        %v559 = vsel %vm401, %v547, %v558
        %vm560 = vcmask 254976
        %561 = vst.msk [vmem:[%s341] sm:$0x3] %vm560, %v559
        %s562 = sand.u32 %s166, 1
        %s563 = scalar_lea.sflag [#allocation3], %s562
        %s564 = sand.u32 %s166, 1
        %s565 = smul.addr %s564, 16
        %s566 = scalar_lea.vmem [#allocation2], %s565
        %s567 = sand.u32 %s194, 1
        %s568 = scalar_lea.sflag [#allocation5], %s567
        %s569 = sand.u32 %s194, 1
        %s570 = smul.addr %s569, 2
        %s571 = scalar_lea.vmem [#allocation4], %s570
        // Predicated region
        $region37: #{tpu_custom_call.1} parent=35 // pred_check
          %p572 = pneg %p176
        $region38: #{tpu_custom_call.1} parent=35 // pred_check_branch
          %574 = sbr.rel (%p572) target = $region40
        $region39: #{tpu_custom_call.1} parent=35 // pred_region
          %s575 = smul.u32 2, %s28
          %s577 = ssub.s32 256, 256
          %578 = vsyncadd %s563, %s577
          %s579 = smul.addr %s27, 4
          %s580 = sadd.s32 %s575, %s579
          %s581 = smul.addr %s580, 128
          %s582 = scalar_lea.hbm %s4, %s581
          %s583 = sshll.u32 %s566, 4
          %s584 = int_to_ptr.vmem [resolvable:$true] %s583
          %589 = dma.vmem_to_hbm [thread:$0]  %s584, 256, %s582, %s563, 128, 128, 8
        $region40: #{tpu_custom_call.1} parent=35 // pred_fallthru
          _
        // Predicated region
        $region41: #{tpu_custom_call.1} parent=35 // pred_check
          %p590 = pneg %p204
        $region42: #{tpu_custom_call.1} parent=35 // pred_check_branch
          %592 = sbr.rel (%p590) target = $region44
        $region43: #{tpu_custom_call.1} parent=35 // pred_region
          %s594 = ssub.s32 32, 32
          %595 = vsyncadd %s568, %s594
          %s596 = smul.addr %s27, 2
          %s597 = sadd.s32 %s28, %s596
          %s598 = smul.addr %s597, 32
          %s599 = scalar_lea.hbm %s5, %s598
          %s601 = sshll.u32 %s571, 4
          %s602 = int_to_ptr.vmem [resolvable:$true] %s601
          %604 = dma.vmem_to_hbm [thread:$0]  %s602, 32, %s599, %s568
        $region44: #{tpu_custom_call.1} parent=35 // pred_fallthru
          _
      $region36: #{tpu_custom_call.1} parent=5 // pred_fallthru
        _
      %p605 = scmp.le.s32.totalorder 2, %s18
      // Predicated region
      $region45: #{tpu_custom_call.1} parent=5 // pred_check
        %p606 = pneg %p605
      $region46: #{tpu_custom_call.1} parent=5 // pred_check_branch
        %608 = sbr.rel (%p606) target = $region48
      $region47: #{tpu_custom_call.1} parent=5 // pred_region
        %s609 = ssub.s32 %s18, 2
        // Predicated region
        $region49: #{tpu_custom_call.1} parent=47 // pred_check
          %p610 = pneg %p182
        $region50: #{tpu_custom_call.1} parent=47 // pred_check_branch
          %612 = sbr.rel (%p610) target = $region52
        $region51: #{tpu_custom_call.1} parent=47 // pred_region
          %s613 = sand.u32 %s167, 1
          %s614 = scalar_lea.sflag [#allocation3], %s613
          %s615 = sand.u32 %s167, 1
          %s616 = smul.addr %s615, 16
          %s617 = scalar_lea.vmem [#allocation2], %s616
          %618 = dma.done %s614, 256
        $region52: #{tpu_custom_call.1} parent=47 // pred_fallthru
          _
        // Predicated region
        $region53: #{tpu_custom_call.1} parent=47 // pred_check
          %p619 = pneg %p210
        $region54: #{tpu_custom_call.1} parent=47 // pred_check_branch
          %621 = sbr.rel (%p619) target = $region56
        $region55: #{tpu_custom_call.1} parent=47 // pred_region
          %s622 = sand.u32 %s195, 1
          %s623 = scalar_lea.sflag [#allocation5], %s622
          %s624 = sand.u32 %s195, 1
          %s625 = smul.addr %s624, 2
          %s626 = scalar_lea.vmem [#allocation4], %s625
          %627 = dma.done %s623, 32
        $region56: #{tpu_custom_call.1} parent=47 // pred_fallthru
          _
      $region48: #{tpu_custom_call.1} parent=5 // pred_fallthru
        _
    $region6: #{tpu_custom_call.1} parent=1 // loop_footer
      %s22 = sadd.s32 1, %s18
    $region7: #{tpu_custom_call.1} parent=1 // loop_footer_branch
      %17 = sbr.rel target = $region3
    $region8: #{tpu_custom_call.1} parent=1 // loop_exit
      _
    %628 = vsyncpa [#allocation3], 1
    %s629 = scalar_lea.sflag [#allocation3], 1
    %630 = vsyncpa %s629, 1
    %631 = vsyncpa [#allocation5], 1
    %s632 = scalar_lea.sflag [#allocation5], 1
    %633 = vsyncpa %s632, 1

</llo_original>
